<compile_context>
chip_gen: v7x
topology: tpu7x:2x2x1
jax: 0.10.0
libtpu: 0.0.40
codegen_flags: <defaults>
</compile_context>

<pallas_src>
import functools

import jax
import jax.numpy as jnp
from jax.experimental import pallas as pl
from jax.experimental.pallas import tpu as pltpu

# ---- "config" (deterministic, in-script; mirrors the PyTorch config) --------
ALPHA = (0.8, 1.2, 0.8, 1.0, 0.8)      # focal alpha -> num_classes = 5
GAMMA = 2.0                            # focal gamma
NUM_CLASSES = len(ALPHA)
SMOOTHING = 0.1
CONFIDENCE = 1.0 - SMOOTHING
FOCAL_WEIGHT = 0.5
SMOOTHING_WEIGHT = 0.5
USE_FOCAL = True
USE_SMOOTHING = True


def _round_up(x, m):
    return (x + m - 1) // m * m


def _mixed_loss_kernel(pred_ref, target_ref, out_ref, acc_ref, *, n_total):
    """pred_ref: (TB, C) float; target_ref: (TB, 1) int32; out_ref: (1, 1) f32."""
    pid = pl.program_id(0)
    n_steps = pl.num_programs(0)

    @pl.when(pid == 0)
    def _():
        acc_ref[...] = jnp.zeros_like(acc_ref)

    logits = pred_ref[...].astype(jnp.float32)          # (TB, C)
    tgt = target_ref[...]                               # (TB, 1) int32
    tb, c = logits.shape

    # Validity mask for the last (partial) tile.  The padded region of the
    # block is *undefined*, so zero the logits and clamp the targets BEFORE
    # the softmax chain to keep NaN/Inf out of the math.
    row = jax.lax.broadcasted_iota(jnp.int32, (tb, 1), 0)
    valid = (pid * tb + row) < n_total                   # (TB, 1) bool
    logits = jnp.where(valid, logits, 0.0)
    tgt = jnp.where(valid, tgt, 0)

    # one-hot(target) along the class (lane) axis via iota compare (bool only).
    col = jax.lax.broadcasted_iota(jnp.int32, (tb, c), 1)
    one_hot = col == tgt                                  # (TB, C) bool

    # Numerically-stable log-softmax pieces over the class (lane) axis.
    m = jnp.max(logits, axis=-1, keepdims=True)           # (TB, 1)
    shifted = logits - m                                   # (TB, C)
    se = jnp.sum(jnp.exp(shifted), axis=-1, keepdims=True)
    lse = jnp.log(se)                                      # (TB, 1)

    # Target log-prob (gather via masked lane reduce): lp_t = shifted[t] - lse
    shifted_t = jnp.sum(jnp.where(one_hot, shifted, 0.0), axis=-1, keepdims=True)
    lp_t = shifted_t - lse                                  # (TB, 1)

    validf = valid.astype(jnp.float32)
    contrib = jnp.zeros((tb, 1), jnp.float32)

    if USE_FOCAL:
        pt = jnp.exp(lp_t)                                  # (TB, 1)
        # at = alpha[target] via a select chain on the target column.
        at = jnp.full((tb, 1), ALPHA[0], jnp.float32)
        for i in range(1, NUM_CLASSES):
            at = jnp.where(tgt == i, jnp.float32(ALPHA[i]), at)
        one_minus_pt = 1.0 - pt
        if float(GAMMA) == 2.0:
            pow_term = one_minus_pt * one_minus_pt
        else:
            pow_term = one_minus_pt ** jnp.float32(GAMMA)
        focal = -at * pow_term * lp_t                        # (TB, 1)
        contrib = contrib + jnp.float32(FOCAL_WEIGHT) * focal

    if USE_SMOOTHING:
        smooth_val = SMOOTHING / (NUM_CLASSES - 1)
        # sum_c log_softmax = sum_c shifted - C * lse   (folded true_dist algebra)
        sum_ls = jnp.sum(shifted, axis=-1, keepdims=True) - jnp.float32(c) * lse
        smooth = -(jnp.float32(smooth_val) * sum_ls
                   + jnp.float32(CONFIDENCE - smooth_val) * lp_t)
        contrib = contrib + jnp.float32(SMOOTHING_WEIGHT) * smooth

    # Lane/sublane-wise accumulation; the single cross-tile reduce happens
    # only at the last step.
    acc_ref[...] = acc_ref[...] + contrib * validf

    @pl.when(pid == n_steps - 1)
    def _():
        out_ref[...] = (jnp.sum(acc_ref[...], axis=0, keepdims=True)
                        * jnp.float32(1.0 / n_total))


def mixed_loss(pred, target, *, max_tile_b=1024):
    """pred: (B, C) logits (any float dtype); target: (B,) int labels. Returns scalar."""
    b, c = pred.shape
    assert c == NUM_CLASSES

    tile_b = min(max_tile_b, _round_up(b, 8))
    tile_b = _round_up(tile_b, 8)            # sublane multiple
    grid = (pl.cdiv(b, tile_b),)             # no wrapper pad; last tile masked in-kernel

    # Only wrapper-side op: tiny (B,) -> (B, 1) int32 target column.
    target_col = target.astype(jnp.int32).reshape(b, 1)

    kernel = functools.partial(_mixed_loss_kernel, n_total=b)

    out = pl.pallas_call(
        kernel,
        out_shape=jax.ShapeDtypeStruct((1, 1), jnp.float32),
        grid_spec=pltpu.PrefetchScalarGridSpec(
            num_scalar_prefetch=0,
            grid=grid,
            in_specs=[
                pl.BlockSpec((tile_b, c), lambda i: (i, 0)),   # pred   (TB, C)
                pl.BlockSpec((tile_b, 1), lambda i: (i, 0)),   # target (TB, 1)
            ],
            out_specs=pl.BlockSpec((1, 1), lambda i: (0, 0)),
            scratch_shapes=[pltpu.VMEM((tile_b, 1), jnp.float32)],
        ),
        compiler_params=pltpu.CompilerParams(
            dimension_semantics=("arbitrary",),     # batch-tile reduction axis
            vmem_limit_bytes=32 * 1024 * 1024,      # safe on v5e/v6e/v7x
        ),
    )(pred, target_col)
    return out[0, 0]


def _reference(pred, target):
    """Pure-JAX reference mirroring the PyTorch MixedLoss forward."""
    pred = pred.astype(jnp.float32)
    one_hot = jax.nn.one_hot(target, NUM_CLASSES, dtype=jnp.float32)
    softmax = jax.nn.softmax(pred, axis=1)
    log_softmax = jax.nn.log_softmax(pred, axis=-1)
    loss = 0.0
    if USE_FOCAL:
        pt = jnp.sum(one_hot * softmax, axis=1)
        at = jnp.asarray(ALPHA, jnp.float32)[target]
        focal = -at * (1.0 - pt) ** GAMMA * jnp.log(pt)
        loss = loss + FOCAL_WEIGHT * jnp.mean(focal)
    if USE_SMOOTHING:
        smooth_val = SMOOTHING / (NUM_CLASSES - 1)
        true_dist = jnp.full_like(pred, smooth_val)
        true_dist = true_dist * (1.0 - one_hot) + one_hot * CONFIDENCE
        loss = loss + SMOOTHING_WEIGHT * jnp.mean(
            jnp.sum(-true_dist * log_softmax, axis=-1))
    return loss


if __name__ == "__main__":
    key = jax.random.PRNGKey(0)
    k_pred, k_tgt, k2_pred, k2_tgt = jax.random.split(key, 4)

    # Test 1: small batch (single grid step, tile rounded up to 8 sublanes).
    batch = 8
    pred = jax.random.normal(k_pred, (batch, NUM_CLASSES), dtype=jnp.float32)
    target = jax.random.randint(k_tgt, (batch,), 0, NUM_CLASSES, dtype=jnp.int32)
    out = jax.block_until_ready(mixed_loss(pred, target))
    ref = _reference(pred, target)
    assert jnp.allclose(out, ref, rtol=1e-4, atol=1e-5), (out, ref)

    # Test 2: batch not a multiple of the tile -> exercises grid accumulation
    # and the in-kernel padding mask (tile_b forced to 128 -> 3 grid steps,
    # last tile partially out of range).
    batch2 = 300
    pred2 = jax.random.normal(k2_pred, (batch2, NUM_CLASSES), dtype=jnp.float32)
    target2 = jax.random.randint(k2_tgt, (batch2,), 0, NUM_CLASSES, dtype=jnp.int32)
    out2 = jax.block_until_ready(mixed_loss(pred2, target2, max_tile_b=128))
    ref2 = _reference(pred2, target2)
    assert jnp.allclose(out2, ref2, rtol=1e-4, atol=1e-5), (out2, ref2)

    print("KERNEL_OK")
</pallas_src>

<mosaic_0001>
module attributes {stable_mosaic.version = 11 : i64} {
  func.func @_mixed_loss_kernel(%arg0: i32, %arg1: memref<8x5xf32, #tpu.memory_space<vmem>>, %arg2: memref<8x1xi32, #tpu.memory_space<vmem>>, %arg3: memref<1x1xf32, #tpu.memory_space<vmem>>, %arg4: memref<8x1xf32, #tpu.memory_space<vmem>>) attributes {dimension_semantics = [#tpu.dimension_semantics<arbitrary>], iteration_bounds = array<i64: 1>, scalar_prefetch = 0 : i64, scratch_operands = 1 : i64, tpu.core_type = #tpu.core_type<tc>, window_params = [{transform_indices = @transform_0, window_bounds = array<i64: 8, 5>}, {transform_indices = @transform_1, window_bounds = array<i64: 8, 1>}, {pipeline_mode = #tpu.pipeline_mode<synchronous>, transform_indices = @transform_2, window_bounds = array<i64: 1, 1>}]} {
    %c0_i32 = arith.constant 0 : i32
    %0 = arith.cmpi eq, %arg0, %c0_i32 : i32
    %1 = arith.extui %0 : i1 to i32
    %c0_i32_0 = arith.constant 0 : i32
    %2 = arith.cmpi ne, %1, %c0_i32_0 : i32
    scf.if %2 {
      %cst_31 = arith.constant 0.000000e+00 : f32
      %86 = vector.broadcast %cst_31 : f32 to vector<8x1xf32>
      %c0_32 = arith.constant 0 : index
      %c0_33 = arith.constant 0 : index
      %87 = vector.load %arg4[%c0_32, %c0_33] : memref<8x1xf32, #tpu.memory_space<vmem>>, vector<8x1xf32>
      tpu.vector_store %arg4[%c0_32, %c0_33], %86 {strides = array<i32>} : memref<8x1xf32, #tpu.memory_space<vmem>>, vector<8x1xf32>,
    } else {
    }
    %c0 = arith.constant 0 : index
    %c0_1 = arith.constant 0 : index
    %3 = vector.load %arg1[%c0, %c0_1] : memref<8x5xf32, #tpu.memory_space<vmem>>, vector<8x5xf32>
    %c0_2 = arith.constant 0 : index
    %c0_3 = arith.constant 0 : index
    %4 = vector.load %arg2[%c0_2, %c0_3] : memref<8x1xi32, #tpu.memory_space<vmem>>, vector<8x1xi32>
    %5 = tpu.iota {dimensions = array<i32: 0>} : vector<8x1xi32>
    %c8_i32 = arith.constant 8 : i32
    %6 = arith.muli %arg0, %c8_i32 : i32
    %7 = vector.broadcast %6 : i32 to vector<8x1xi32>
    %8 = arith.addi %7, %5 : vector<8x1xi32>
    %c8_i32_4 = arith.constant 8 : i32
    %9 = vector.broadcast %c8_i32_4 : i32 to vector<8x1xi32>
    %10 = arith.cmpi slt, %8, %9 : vector<8x1xi32>
    %cst = arith.constant 0.000000e+00 : f32
    %11 = vector.shape_cast %10 : vector<8x1xi1> to vector<8x1xi1>
    %12 = vector.broadcast %11 : vector<8x1xi1> to vector<8x5xi1>
    %13 = vector.broadcast %cst : f32 to vector<8x5xf32>
    %14 = arith.select %12, %3, %13 : vector<8x5xi1>, vector<8x5xf32>
    %c0_i32_5 = arith.constant 0 : i32
    %15 = vector.broadcast %c0_i32_5 : i32 to vector<8x1xi32>
    %16 = arith.select %10, %4, %15 : vector<8x1xi1>, vector<8x1xi32>
    %17 = tpu.iota {dimensions = array<i32: 1>} : vector<8x5xi32>
    %18 = vector.broadcast %16 : vector<8x1xi32> to vector<8x5xi32>
    %19 = arith.cmpi eq, %17, %18 : vector<8x5xi32>
    %cst_6 = arith.constant dense<0xFF800000> : vector<8xf32>
    %20 = vector.multi_reduction <maximumf>, %14, %cst_6 [1] : vector<8x5xf32> to vector<8xf32>
    %21 = vector.shape_cast %20 : vector<8xf32> to vector<8x1xf32>
    %22 = vector.broadcast %21 : vector<8x1xf32> to vector<8x5xf32>
    %23 = arith.subf %14, %22 : vector<8x5xf32>
    %24 = math.exp %23 : vector<8x5xf32>
    %cst_7 = arith.constant dense<0.000000e+00> : vector<8xf32>
    %25 = vector.multi_reduction <add>, %24, %cst_7 [1] : vector<8x5xf32> to vector<8xf32>
    %26 = vector.shape_cast %25 : vector<8xf32> to vector<8x1xf32>
    %27 = math.log %26 : vector<8x1xf32>
    %cst_8 = arith.constant 0.000000e+00 : f32
    %28 = vector.broadcast %cst_8 : f32 to vector<8x5xf32>
    %29 = arith.select %19, %23, %28 : vector<8x5xi1>, vector<8x5xf32>
    %cst_9 = arith.constant dense<0.000000e+00> : vector<8xf32>
    %30 = vector.multi_reduction <add>, %29, %cst_9 [1] : vector<8x5xf32> to vector<8xf32>
    %31 = vector.shape_cast %30 : vector<8xf32> to vector<8x1xf32>
    %32 = arith.subf %31, %27 : vector<8x1xf32>
    %33 = arith.extui %10 : vector<8x1xi1> to vector<8x1xi32>
    %34 = arith.sitofp %33 : vector<8x1xi32> to vector<8x1xf32>
    %cst_10 = arith.constant 0.000000e+00 : f32
    %35 = vector.broadcast %cst_10 : f32 to vector<8x1xf32>
    %36 = math.exp %32 : vector<8x1xf32>
    %cst_11 = arith.constant 8.000000e-01 : f32
    %37 = vector.broadcast %cst_11 : f32 to vector<8x1xf32>
    %c1_i32 = arith.constant 1 : i32
    %38 = vector.broadcast %c1_i32 : i32 to vector<8x1xi32>
    %39 = arith.cmpi eq, %16, %38 : vector<8x1xi32>
    %cst_12 = arith.constant 1.200000e+00 : f32
    %40 = vector.broadcast %cst_12 : f32 to vector<8x1xf32>
    %41 = arith.select %39, %40, %37 : vector<8x1xi1>, vector<8x1xf32>
    %c2_i32 = arith.constant 2 : i32
    %42 = vector.broadcast %c2_i32 : i32 to vector<8x1xi32>
    %43 = arith.cmpi eq, %16, %42 : vector<8x1xi32>
    %cst_13 = arith.constant 8.000000e-01 : f32
    %44 = vector.broadcast %cst_13 : f32 to vector<8x1xf32>
    %45 = arith.select %43, %44, %41 : vector<8x1xi1>, vector<8x1xf32>
    %c3_i32 = arith.constant 3 : i32
    %46 = vector.broadcast %c3_i32 : i32 to vector<8x1xi32>
    %47 = arith.cmpi eq, %16, %46 : vector<8x1xi32>
    %cst_14 = arith.constant 1.000000e+00 : f32
    %48 = vector.broadcast %cst_14 : f32 to vector<8x1xf32>
    %49 = arith.select %47, %48, %45 : vector<8x1xi1>, vector<8x1xf32>
    %c4_i32 = arith.constant 4 : i32
    %50 = vector.broadcast %c4_i32 : i32 to vector<8x1xi32>
    %51 = arith.cmpi eq, %16, %50 : vector<8x1xi32>
    %cst_15 = arith.constant 8.000000e-01 : f32
    %52 = vector.broadcast %cst_15 : f32 to vector<8x1xf32>
    %53 = arith.select %51, %52, %49 : vector<8x1xi1>, vector<8x1xf32>
    %cst_16 = arith.constant 1.000000e+00 : f32
    %54 = vector.broadcast %cst_16 : f32 to vector<8x1xf32>
    %55 = arith.subf %54, %36 : vector<8x1xf32>
    %56 = arith.mulf %55, %55 : vector<8x1xf32>
    %cst_17 = arith.constant 0.000000e+00 : f32
    %57 = vector.broadcast %cst_17 : f32 to vector<8x1xf32>
    %58 = arith.subf %57, %53 : vector<8x1xf32>
    %59 = arith.mulf %58, %56 : vector<8x1xf32>
    %60 = arith.mulf %59, %32 : vector<8x1xf32>
    %cst_18 = arith.constant 5.000000e-01 : f32
    %61 = vector.broadcast %cst_18 : f32 to vector<8x1xf32>
    %62 = arith.mulf %61, %60 : vector<8x1xf32>
    %63 = arith.addf %35, %62 : vector<8x1xf32>
    %cst_19 = arith.constant dense<0.000000e+00> : vector<8xf32>
    %64 = vector.multi_reduction <add>, %23, %cst_19 [1] : vector<8x5xf32> to vector<8xf32>
    %65 = vector.shape_cast %64 : vector<8xf32> to vector<8x1xf32>
    %cst_20 = arith.constant 5.000000e+00 : f32
    %66 = vector.broadcast %cst_20 : f32 to vector<8x1xf32>
    %67 = arith.mulf %66, %27 : vector<8x1xf32>
    %68 = arith.subf %65, %67 : vector<8x1xf32>
    %cst_21 = arith.constant 2.500000e-02 : f32
    %69 = vector.broadcast %cst_21 : f32 to vector<8x1xf32>
    %70 = arith.mulf %69, %68 : vector<8x1xf32>
    %cst_22 = arith.constant 8.750000e-01 : f32
    %71 = vector.broadcast %cst_22 : f32 to vector<8x1xf32>
    %72 = arith.mulf %71, %32 : vector<8x1xf32>
    %73 = arith.addf %70, %72 : vector<8x1xf32>
    %cst_23 = arith.constant 0.000000e+00 : f32
    %74 = vector.broadcast %cst_23 : f32 to vector<8x1xf32>
    %75 = arith.subf %74, %73 : vector<8x1xf32>
    %cst_24 = arith.constant 5.000000e-01 : f32
    %76 = vector.broadcast %cst_24 : f32 to vector<8x1xf32>
    %77 = arith.mulf %76, %75 : vector<8x1xf32>
    %78 = arith.addf %63, %77 : vector<8x1xf32>
    %c0_25 = arith.constant 0 : index
    %c0_26 = arith.constant 0 : index
    %79 = vector.load %arg4[%c0_25, %c0_26] : memref<8x1xf32, #tpu.memory_space<vmem>>, vector<8x1xf32>
    %80 = arith.mulf %78, %34 : vector<8x1xf32>
    %81 = arith.addf %79, %80 : vector<8x1xf32>
    %c0_27 = arith.constant 0 : index
    %c0_28 = arith.constant 0 : index
    %82 = vector.load %arg4[%c0_27, %c0_28] : memref<8x1xf32, #tpu.memory_space<vmem>>, vector<8x1xf32>
    tpu.vector_store %arg4[%c0_27, %c0_28], %81 {strides = array<i32>} : memref<8x1xf32, #tpu.memory_space<vmem>>, vector<8x1xf32>,
    %c0_i32_29 = arith.constant 0 : i32
    %83 = arith.cmpi eq, %arg0, %c0_i32_29 : i32
    %84 = arith.extui %83 : i1 to i32
    %c0_i32_30 = arith.constant 0 : i32
    %85 = arith.cmpi ne, %84, %c0_i32_30 : i32
    scf.if %85 {
      %c0_31 = arith.constant 0 : index
      %c0_32 = arith.constant 0 : index
      %86 = vector.load %arg4[%c0_31, %c0_32] : memref<8x1xf32, #tpu.memory_space<vmem>>, vector<8x1xf32>
      %cst_33 = arith.constant dense<0.000000e+00> : vector<1xf32>
      %87 = vector.multi_reduction <add>, %86, %cst_33 [0] : vector<8x1xf32> to vector<1xf32>
      %88 = vector.shape_cast %87 : vector<1xf32> to vector<1x1xf32>
      %cst_34 = arith.constant 1.250000e-01 : f32
      %89 = vector.broadcast %cst_34 : f32 to vector<1x1xf32>
      %90 = arith.mulf %88, %89 : vector<1x1xf32>
      %c0_35 = arith.constant 0 : index
      %c0_36 = arith.constant 0 : index
      %91 = vector.load %arg3[%c0_35, %c0_36] : memref<1x1xf32, #tpu.memory_space<vmem>>, vector<1x1xf32>
      tpu.vector_store %arg3[%c0_35, %c0_36], %90 {strides = array<i32>} : memref<1x1xf32, #tpu.memory_space<vmem>>, vector<1x1xf32>,
    } else {
    }
    return
  }
  func.func @transform_0(%arg0: i32) -> (i32, i32) {
    %c0_i32 = arith.constant 0 : i32
    %c0_i32_0 = arith.constant 0 : i32
    return %arg0, %c0_i32 : i32, i32
  }
  func.func @transform_1(%arg0: i32) -> (i32, i32) {
    %c0_i32 = arith.constant 0 : i32
    %c0_i32_0 = arith.constant 0 : i32
    return %arg0, %c0_i32 : i32, i32
  }
  func.func @transform_2(%arg0: i32) -> (i32, i32) {
    %c0_i32 = arith.constant 0 : i32
    %c0_i32_0 = arith.constant 0 : i32
    %c0_i32_1 = arith.constant 0 : i32
    return %c0_i32, %c0_i32_0 : i32, i32
  }
}

</mosaic_0001>

<llo_original>
// kernel: tpu_custom_call.1
$region0: #{tpu_custom_call.1}
  #allocation0 [shape = 'u32[]', space=smem, size = 0x4, offset = 0x4, fixed_abs, tag = 'smem constant byte address 0x4 - core index']
  #allocation1 [shape = 'u32[144,128]{1,0:T(1,128)}', space=vmem, size = 0x12000, scoped, tag = 'internal scratch']
  #allocation2 [shape = 'f32[8,1]{1,0:T(8,128)}', space=vmem, size = 0x1000, scoped, tag = 'scratch operand']
  %s0 = inlined_call_operand.vmem [shape: f32[8,5], index: 0, kind: input, shape index: {}]
  %s1 = inlined_call_operand.vmem [shape: s32[8,1], index: 1, kind: input, shape index: {}]
  %s2 = inlined_call_operand.hbm [shape: f32[1,1], index: 2, kind: output, shape index: {}]
  %s3 = sld [smem:[#allocation0]]
  $region26: #{tpu_custom_call.1} parent=0
    _
  %s5 = ssub.s32 1, %s3
  %s6 = scalar_select 0, %s5, %s3
  $region1: #{tpu_custom_call.1} parent=0
    #allocation3 [shape = 'u8[512]{0}', space=vmem, size = 0x400, scoped, tag = 'output window, operand 0, single buffered']
    #allocation4 [shape = 's32[1]{0}', space=sflag, size = 0x4, scoped, tag = 'scoped memory for tpu_custom_call.1']
    %7 = vsyncpa [#allocation4], 0
    // Predicated region
    $region2: #{tpu_custom_call.1} parent=1 // pred_check
      _
    $region3: #{tpu_custom_call.1} parent=1 // pred_check_branch
      %9 = sbr.rel (0) target = $region5
    $region4: #{tpu_custom_call.1} parent=1 // pred_region
      _
    $region5: #{tpu_custom_call.1} parent=1 // pred_fallthru
      _
    // Predicated region
    $region6: #{tpu_custom_call.1} parent=1 // pred_check
      _
    $region7: #{tpu_custom_call.1} parent=1 // pred_check_branch
      %11 = sbr.rel (0) target = $region9
    $region8: #{tpu_custom_call.1} parent=1 // pred_region
      _
    $region9: #{tpu_custom_call.1} parent=1 // pred_fallthru
      _
    %p12 = scmp.eq.s32.totalorder 0, 0
    // Predicated region
    $region10: #{tpu_custom_call.1} parent=1 // pred_check
      %p13 = pneg %p12
    $region11: #{tpu_custom_call.1} parent=1 // pred_check_branch
      %15 = sbr.rel (%p13) target = $region13
    $region12: #{tpu_custom_call.1} parent=1 // pred_region
      %vm16 = vcmask 7168
      %17 = vst.msk [vmem:[#allocation2] sm:$0xff] %vm16, 0.0
    $region13: #{tpu_custom_call.1} parent=1 // pred_fallthru
      _
    %v18 = vld [vmem:[%s0] sm:$0xff]
    %v19 = vld [vmem:[%s1] sm:$0xff]
    %v20 = vlaneseq
    %v21 = vshrl.u32 %v20, 7
    %s22 = smul.u32 0, 8
    %v23 = vstv %s22
    %v24 = vadd.s32 %v23, %v21
    %vm25 = vcmp.lt.s32.totalorder %v24, 8
    %v26 = vsel %vm25, 1, 0
    %vm27 = vcmp.eq.s32.totalorder %v26, 1
    %v28 = vsel %vm27, %v18, 0.0
    %v29 = vsel %vm25, %v19, 0
    %v30 = vlaneseq
    %v31 = vand.u32 %v30, 127
    %32 = vset.pattern.permute.xlu0 0
    %33 = vperm.xlu0 %32, %v29
    %v34 = vpop.permute.xlu0 %33
    %vm35 = vcmp.eq.s32.totalorder %v31, %v34
    %vm36 = vcmask 39936
    %v37 = vsel %vm36, %v28, -inf
    %38 = vmax.xlane.f32.xlu0 %v37
    %v39 = vpop.xlane.xlu0 %38
    %v40 = vsub.f32 %v28, %v39
    %v41 = vmul.f32 %v40, 1.442695
    %v42 = vpow.pop %v41
    %v43 = vsel %vm36, %v42, 0.0
    %44 = vadd.xlane.f32.xlu0 %v43
    %v45 = vpop.xlane.xlu0 %44
    %v46 = vlog2.pop %v45
    %v47 = vmul.f32 %v46, 0.6931472
    %v48 = vsel %vm35, %v40, 0.0
    %v49 = vsel %vm36, %v48, 0.0
    %50 = vadd.xlane.f32.xlu0 %v49
    %v51 = vpop.xlane.xlu0 %50
    %v52 = vsub.f32 %v51, %v47
    %v53 = vcvt.s32.f32 %v26
    %v54 = vmul.f32 %v52, 1.442695
    %v55 = vpow.pop %v54
    %vm56 = vcmp.eq.s32.totalorder %v29, 1
    %v57 = vsel %vm56, 1.2, 0.8
    %vm58 = vcmp.eq.s32.totalorder %v29, 2
    %v59 = vsel %vm58, 0.8, %v57
    %vm60 = vcmp.eq.s32.totalorder %v29, 3
    %v61 = vsel %vm60, 1.0, %v59
    %vm62 = vcmp.eq.s32.totalorder %v29, 4
    %v63 = vsel %vm62, 0.8, %v61
    %v64 = vsub.f32 1.0, %v55
    %v65 = vmul.f32 %v64, %v64
    %v66 = vsub.f32 0.0, %v63
    %v67 = vmul.f32 %v66, %v65
    %v68 = vmul.f32 %v67, %v52
    %v69 = vmul.f32 %v68, 0.5
    %v70 = vadd.f32 %v69, 0.0
    %v71 = vsel %vm36, %v40, 0.0
    %72 = vadd.xlane.f32.xlu0 %v71
    %v73 = vpop.xlane.xlu0 %72
    %v74 = vmul.f32 %v47, 5.0
    %v75 = vsub.f32 %v73, %v74
    %v76 = vmul.f32 %v75, 0.025
    %v77 = vmul.f32 %v52, 0.875
    %v78 = vadd.f32 %v76, %v77
    %v79 = vsub.f32 0.0, %v78
    %v80 = vmul.f32 %v79, 0.5
    %v81 = vadd.f32 %v70, %v80
    %v82 = vld [vmem:[#allocation2] sm:$0xff]
    %v83 = vmul.f32 %v81, %v53
    %v84 = vadd.f32 %v82, %v83
    %vm85 = vcmask 7168
    %86 = vst.msk [vmem:[#allocation2] sm:$0xff] %vm85, %v84
    // Predicated region
    $region14: #{tpu_custom_call.1} parent=1 // pred_check
      %p87 = pneg %p12
    $region15: #{tpu_custom_call.1} parent=1 // pred_check_branch
      %89 = sbr.rel (%p87) target = $region17
    $region16: #{tpu_custom_call.1} parent=1 // pred_region
      %v90 = vld [vmem:[#allocation2] sm:$0xff]
      %v91 = vsel %vm85, %v90, 0.0
      %v92 = vrot.slane %v91, 4
      %v93 = vadd.f32 %v91, %v92
      %v94 = vrot.slane %v93, 2
      %v95 = vadd.f32 %v93, %v94
      %v96 = vrot.slane %v95, 1
      %v97 = vadd.f32 %v95, %v96
      %v98 = vmul.f32 %v97, 0.125
      %vm99 = vcmask 0
      %100 = vst.msk [vmem:[#allocation3] sm:$0x1] %vm99, %v98
    $region17: #{tpu_custom_call.1} parent=1 // pred_fallthru
      _
    // Predicated region
    $region18: #{tpu_custom_call.1} parent=1 // pred_check
      _
    $region19: #{tpu_custom_call.1} parent=1 // pred_check_branch
      %102 = sbr.rel (0) target = $region21
    $region20: #{tpu_custom_call.1} parent=1 // pred_region
      %s104 = ssub.s32 16, 16
      %105 = vsyncadd [#allocation4], %s104
      %s107 = sshll.u32 [#allocation3], 4
      %s108 = int_to_ptr.vmem [resolvable:$true] %s107
      %110 = dma.vmem_to_hbm [thread:$0]  %s108, 16, %s2, [#allocation4]
    $region21: #{tpu_custom_call.1} parent=1 // pred_fallthru
      _
    // Predicated region
    $region22: #{tpu_custom_call.1} parent=1 // pred_check
      _
    $region23: #{tpu_custom_call.1} parent=1 // pred_check_branch
      %112 = sbr.rel (0) target = $region25
    $region24: #{tpu_custom_call.1} parent=1 // pred_region
      %113 = dma.done [#allocation4], 16
    $region25: #{tpu_custom_call.1} parent=1 // pred_fallthru
      _
    %114 = vsyncpa [#allocation4], 1

</llo_original>
